<compile_context>
chip_gen: v5e
topology: v5e:2x2
jax: 0.10.0
libtpu: 0.0.40
codegen_flags: <defaults>
</compile_context>

<pallas_src>
import numpy as np
import jax
import jax.numpy as jnp
from jax.experimental import pallas as pl
from jax.experimental.pallas import tpu as pltpu


def _stft_mag_kernel(frames_ref, basis_ref, out_ref, acc_ref):
    # Grid = (core_split, frame_tile_index); axis 1 is the reduction over frame tiles.
    i = pl.program_id(1)

    @pl.when(i == 0)
    def _():
        acc_ref[...] = jnp.zeros_like(acc_ref)

    # Fused windowed real-DFT: one bf16 MXU matmul, f32 accumulation.
    y = jnp.dot(frames_ref[...], basis_ref[...],
                preferred_element_type=jnp.float32)              # (TM, 2F) f32
    acc_ref[...] += jnp.sum(y * y, axis=0, keepdims=True)        # (1, 2F)

    @pl.when(i == pl.num_programs(1) - 1)
    def _():
        # Lane-dense full-block store of this core's partial sum of squares.
        out_ref[...] = jnp.broadcast_to(acc_ref[...], out_ref.shape)


def stft_mag(x, nfft=1024, hop=256, frame_tile=256, num_core_splits=2):
    """Pallas equivalent of STFTMag.forward for 1-D x (the only shape the torch code accepts)."""
    assert frame_tile % 16 == 0, "frame_tile must be a multiple of 16 (bf16 sublane packing)"
    x = jnp.asarray(x, jnp.float32)
    T = x.shape[-1]
    F = nfft // 2 + 1
    two_f = 2 * F
    nc = num_core_splits

    # torch.stft defaults: center=True with reflect padding of nfft//2 on each side.
    x_pad = jnp.pad(x, (nfft // 2, nfft // 2), mode="reflect")
    n_frames = 1 + T // hop

    # frames[t, n] = x_pad[t*hop + n].  When hop | nfft, build from contiguous strided
    # slices (cheap memcpy-style fusion) instead of an XLA gather.
    if nfft % hop == 0:
        R = nfft // hop
        n_chunks = (n_frames - 1) + R
        xc = x_pad[: n_chunks * hop].reshape(n_chunks, hop)
        frames = jnp.concatenate([xc[r: r + n_frames] for r in range(R)], axis=1)
    else:
        idx = (jnp.arange(n_frames) * hop)[:, None] + jnp.arange(nfft)[None, :]
        frames = x_pad[idx]

    # Pad frame count so the grid splits evenly; zero frames add 0 to the squared sums.
    tile = frame_tile * nc
    tt_pad = ((n_frames + tile - 1) // tile) * tile
    frames = jnp.pad(frames, ((0, tt_pad - n_frames), (0, 0))).astype(jnp.bfloat16)

    # Windowed real-DFT bases, fused [cos | -sin] -> (nfft, 2F), bf16.
    # (Periodic Hann == torch.hann_window default.)
    n = np.arange(nfft, dtype=np.float64)
    w = 0.5 - 0.5 * np.cos(2.0 * np.pi * n / nfft)
    f = np.arange(F, dtype=np.float64)
    ang = 2.0 * np.pi * np.outer(n, f) / nfft
    basis = np.concatenate([w[:, None] * np.cos(ang), -w[:, None] * np.sin(ang)], axis=1)
    basis = jnp.asarray(basis, dtype=jnp.bfloat16)               # (nfft, 2F)

    tiles_per_core = tt_pad // (frame_tile * nc)

    partials = pl.pallas_call(
        _stft_mag_kernel,
        out_shape=jax.ShapeDtypeStruct((nc * 8, two_f), jnp.float32),
        grid_spec=pltpu.PrefetchScalarGridSpec(
            num_scalar_prefetch=0,
            grid=(nc, tiles_per_core),
            in_specs=[
                pl.BlockSpec((frame_tile, nfft),
                             lambda c, i: (c * tiles_per_core + i, 0)),
                # Constant basis: block never changes, so the pipeline re-copies it only once.
                pl.BlockSpec((nfft, two_f), lambda c, i: (0, 0)),
            ],
            out_specs=pl.BlockSpec((8, two_f), lambda c, i: (c, 0)),
            scratch_shapes=[pltpu.VMEM((1, two_f), jnp.float32)],
        ),
        compiler_params=pltpu.CompilerParams(
            dimension_semantics=("parallel", "arbitrary")),
    )(frames, basis)

    # Combine the per-core partial sums of squares, take sqrt, split back into (2, F).
    ssq = partials.reshape(nc, 8, two_f)[:, 0, :].sum(axis=0)    # (2F,)
    return jnp.sqrt(ssq).reshape(2, F)


def _reference(x, nfft, hop):
    """Pure-JAX reference with the exact same torch.stft semantics (for a sanity check)."""
    x = x.astype(jnp.float32)
    T = x.shape[-1]
    x_pad = jnp.pad(x, (nfft // 2, nfft // 2), mode="reflect")
    n_frames = 1 + T // hop
    idx = (jnp.arange(n_frames) * hop)[:, None] + jnp.arange(nfft)[None, :]
    frames = x_pad[idx]
    w = 0.5 - 0.5 * jnp.cos(2.0 * jnp.pi * jnp.arange(nfft) / nfft)
    spec = jnp.fft.rfft(frames * w[None, :], n=nfft, axis=-1)    # (TT, F)
    return jnp.sqrt(
        jnp.stack([jnp.sum(spec.real ** 2, axis=0), jnp.sum(spec.imag ** 2, axis=0)], axis=0)
    )


if __name__ == "__main__":
    # Small shapes consistent with the module (scaled-down nfft/hop).
    nfft, hop, T = 256, 64, 4096
    key = jax.random.PRNGKey(0)
    x = jax.random.normal(key, (T,), dtype=jnp.float32)

    ref = _reference(x, nfft, hop)

    # Production-style tiling (large MXU tile; single reduction step per core split here).
    mag = jax.block_until_ready(stft_mag(x, nfft=nfft, hop=hop, frame_tile=256))
    assert mag.shape == (2, nfft // 2 + 1) and mag.dtype == jnp.float32
    np.testing.assert_allclose(np.asarray(mag), np.asarray(ref), rtol=1e-2, atol=1e-1)

    # Smaller tile to exercise the multi-step accumulation loop on both core splits.
    mag2 = jax.block_until_ready(stft_mag(x, nfft=nfft, hop=hop, frame_tile=16))
    np.testing.assert_allclose(np.asarray(mag2), np.asarray(ref), rtol=1e-2, atol=1e-1)

    print("KERNEL_OK")
</pallas_src>

<mosaic_0001>
module attributes {stable_mosaic.version = 11 : i64} {
  func.func @_stft_mag_kernel(%arg0: i32, %arg1: i32, %arg2: memref<256x256xbf16, #tpu.memory_space<vmem>>, %arg3: memref<256x258xbf16, #tpu.memory_space<vmem>>, %arg4: memref<8x258xf32, #tpu.memory_space<vmem>>, %arg5: memref<1x258xf32, #tpu.memory_space<vmem>>) attributes {dimension_semantics = [#tpu.dimension_semantics<parallel>, #tpu.dimension_semantics<arbitrary>], iteration_bounds = array<i64: 2, 1>, scalar_prefetch = 0 : i64, scratch_operands = 1 : i64, tpu.core_type = #tpu.core_type<tc>, window_params = [{transform_indices = @transform_0, window_bounds = array<i64: 256, 256>}, {pipeline_mode = #tpu.pipeline_mode<synchronous>, transform_indices = @transform_1, window_bounds = array<i64: 256, 258>}, {transform_indices = @transform_2, window_bounds = array<i64: 8, 258>}]} {
    %c0_i32 = arith.constant 0 : i32
    %0 = arith.cmpi eq, %arg1, %c0_i32 : i32
    %1 = arith.extui %0 : i1 to i32
    %c0_i32_0 = arith.constant 0 : i32
    %2 = arith.cmpi ne, %1, %c0_i32_0 : i32
    scf.if %2 {
      %cst_11 = arith.constant 0.000000e+00 : f32
      %15 = vector.broadcast %cst_11 : f32 to vector<1x258xf32>
      %c0_12 = arith.constant 0 : index
      %c0_13 = arith.constant 0 : index
      %16 = vector.load %arg5[%c0_12, %c0_13] : memref<1x258xf32, #tpu.memory_space<vmem>>, vector<1x258xf32>
      tpu.vector_store %arg5[%c0_12, %c0_13], %15 {strides = array<i32>} : memref<1x258xf32, #tpu.memory_space<vmem>>, vector<1x258xf32>,
    } else {
    }
    %c0 = arith.constant 0 : index
    %c0_1 = arith.constant 0 : index
    %3 = vector.load %arg2[%c0, %c0_1] : memref<256x256xbf16, #tpu.memory_space<vmem>>, vector<256x256xbf16>
    %c0_2 = arith.constant 0 : index
    %c0_3 = arith.constant 0 : index
    %4 = vector.load %arg3[%c0_2, %c0_3] : memref<256x258xbf16, #tpu.memory_space<vmem>>, vector<256x258xbf16>
    %cst = arith.constant dense<0.000000e+00> : vector<256x258xf32>
    %5 = tpu.matmul %3, %4, %cst {dimension_numbers = #tpu.dot_dimension_numbers<[1], [0], [0], [1], [0, 0, 1, 1], [], []>} : vector<256x256xbf16>, vector<256x258xbf16>, vector<256x258xf32> -> vector<256x258xf32>
    %c0_4 = arith.constant 0 : index
    %c0_5 = arith.constant 0 : index
    %6 = vector.load %arg5[%c0_4, %c0_5] : memref<1x258xf32, #tpu.memory_space<vmem>>, vector<1x258xf32>
    %7 = arith.mulf %5, %5 : vector<256x258xf32>
    %cst_6 = arith.constant dense<0.000000e+00> : vector<258xf32>
    %8 = vector.multi_reduction <add>, %7, %cst_6 [0] : vector<256x258xf32> to vector<258xf32>
    %9 = vector.shape_cast %8 : vector<258xf32> to vector<1x258xf32>
    %10 = arith.addf %6, %9 : vector<1x258xf32>
    %c0_7 = arith.constant 0 : index
    %c0_8 = arith.constant 0 : index
    %11 = vector.load %arg5[%c0_7, %c0_8] : memref<1x258xf32, #tpu.memory_space<vmem>>, vector<1x258xf32>
    tpu.vector_store %arg5[%c0_7, %c0_8], %10 {strides = array<i32>} : memref<1x258xf32, #tpu.memory_space<vmem>>, vector<1x258xf32>,
    %c0_i32_9 = arith.constant 0 : i32
    %12 = arith.cmpi eq, %arg1, %c0_i32_9 : i32
    %13 = arith.extui %12 : i1 to i32
    %c0_i32_10 = arith.constant 0 : i32
    %14 = arith.cmpi ne, %13, %c0_i32_10 : i32
    scf.if %14 {
      %c0_11 = arith.constant 0 : index
      %c0_12 = arith.constant 0 : index
      %15 = vector.load %arg5[%c0_11, %c0_12] : memref<1x258xf32, #tpu.memory_space<vmem>>, vector<1x258xf32>
      %16 = vector.shape_cast %15 : vector<1x258xf32> to vector<1x258xf32>
      %17 = vector.broadcast %16 : vector<1x258xf32> to vector<8x258xf32>
      %c0_13 = arith.constant 0 : index
      %c0_14 = arith.constant 0 : index
      %18 = vector.load %arg4[%c0_13, %c0_14] : memref<8x258xf32, #tpu.memory_space<vmem>>, vector<8x258xf32>
      tpu.vector_store %arg4[%c0_13, %c0_14], %17 {strides = array<i32>} : memref<8x258xf32, #tpu.memory_space<vmem>>, vector<8x258xf32>,
    } else {
    }
    return
  }
  func.func @transform_0(%arg0: i32, %arg1: i32) -> (i32, i32) {
    %c1_i32 = arith.constant 1 : i32
    %0 = arith.muli %arg0, %c1_i32 : i32
    %1 = arith.addi %0, %arg1 : i32
    %c0_i32 = arith.constant 0 : i32
    %c0_i32_0 = arith.constant 0 : i32
    return %1, %c0_i32 : i32, i32
  }
  func.func @transform_1(%arg0: i32, %arg1: i32) -> (i32, i32) {
    %c0_i32 = arith.constant 0 : i32
    %c0_i32_0 = arith.constant 0 : i32
    %c0_i32_1 = arith.constant 0 : i32
    return %c0_i32, %c0_i32_0 : i32, i32
  }
  func.func @transform_2(%arg0: i32, %arg1: i32) -> (i32, i32) {
    %c0_i32 = arith.constant 0 : i32
    %c0_i32_0 = arith.constant 0 : i32
    return %arg0, %c0_i32 : i32, i32
  }
}

</mosaic_0001>

<llo_original>
// kernel: tpu_custom_call.1
$region0: #{tpu_custom_call.1}
  #allocation0 [shape = 'u32[]', space=smem, size = 0x4, offset = 0x4, fixed_abs, tag = 'smem constant byte address 0x4 - core index']
  #allocation1 [shape = 'u32[72,128]{1,0:T(1,128)}', space=vmem, size = 0x9000, scoped, tag = 'internal scratch']
  #allocation2 [shape = 'f32[1,258]{1,0:T(1,128)}', space=vmem, size = 0x600, scoped, tag = 'scratch operand']
  %s0 = inlined_call_operand.vmem [shape: bf16[512,256], index: 0, kind: input, shape index: {}]
  %s1 = inlined_call_operand.vmem [shape: bf16[256,258], index: 1, kind: input, shape index: {}]
  %s2 = inlined_call_operand.hbm [shape: f32[16,258], index: 2, kind: output, shape index: {}]
  %s3 = sld [smem:[#allocation0]]
  $region49: #{tpu_custom_call.1} parent=0
    _
  %s5 = ssub.s32 1, %s3
  %s6 = scalar_select 0, %s5, %s3
  $region1: #{tpu_custom_call.1} parent=0
    #allocation3 [shape = 'u8[24576]{0}', space=vmem, size = 0x6000, scoped, tag = 'output window, operand 0']
    #allocation4 [shape = 's32[2]{0}', space=sflag, size = 0x8, scoped, tag = 'scoped memory for tpu_custom_call.1']
    %7 = vsyncpa [#allocation4], 0
    %s8 = scalar_lea.sflag [#allocation4], 1
    %9 = vsyncpa %s8, 0
    loop: start=0, step=1, limit=4
    $region2: #{tpu_custom_call.1} parent=1 // loop_pre_header
      _
    $region3: #{tpu_custom_call.1} parent=1 // loop_header
      %s11 = sphi 0, %s15
      %p12 = scmp.ge.s32.totalorder %s11, 4
      %s18 = sphi 0, %s30
      %s19 = sphi 0, %s26
      %s20 = sphi 0, %s18
      %s21 = sphi 0, %s19
      %s22 = sphi 0, %s20
      %s23 = sphi 0, %s21
      %s35 = sphi 0, %s37
      %s38 = sphi 0, %s35
      %s39 = sphi 0, %s38
      %s55 = sphi 0, %s39
      %s59 = sphi 0, %s59
      %s61 = sphi 0, %s59
      %s62 = sphi 0, %s61
      %s76 = sphi 0, %s62
      %s82 = sphi 0, %s84
      %s85 = sphi 0, %s82
      %s86 = sphi 0, %s85
      %s102 = sphi 0, %s86
    $region4: #{tpu_custom_call.1} parent=1 // loop_header_branch
      %14 = sbr.rel (%p12) target = $region8
    $region5: #{tpu_custom_call.1} parent=1 // loop_body
      %s16 = ssub.s32 %s11, 1
      %s17 = ssub.s32 %s11, 2
      %s24 = sadd.s32 1, %s19
      %p25 = scmp.ge.s32.totalorder %s24, 1
      %s26 = scalar_select %p25, 0, %s24
      %s27 = sadd.s32 1, %s18
      %s28 = scalar_select %p25, %s27, %s18
      %p29 = scmp.ge.s32.totalorder %s28, 2
      %s30 = scalar_select %p29, 0, %s28
      %s31 = sadd.s32 %s18, %s19
      %s32 = sadd.s32 %s30, %s26
      %s33 = ssub.s32 %s31, %s32
      %p34 = scmp.eq.s32.totalorder %s33, 0
      %s36 = sadd.s32 %s35, 1
      %s37 = scalar_select %p34, %s35, %s36
      %p40 = pneg %p34
      %p41 = scmp.eq.s32.totalorder %s11, 1
      %p42 = por %p40, %p41
      %p43 = scmp.ne.s32.totalorder %s35, %s38
      %p44 = scmp.eq.s32.totalorder %s11, 0
      %p45 = por %p43, %p44
      %p46 = scmp.ne.s32.totalorder %s35, %s38
      %p47 = scmp.eq.s32.totalorder %s16, 1
      %p48 = por %p46, %p47
      %p49 = scmp.ne.s32.totalorder %s38, %s39
      %p50 = scmp.eq.s32.totalorder %s16, 0
      %p51 = por %p49, %p50
      %p52 = scmp.ne.s32.totalorder %s38, %s39
      %p53 = scmp.eq.s32.totalorder %s17, 1
      %p54 = por %p52, %p53
      %p56 = scmp.ne.s32.totalorder %s39, %s55
      %p57 = scmp.eq.s32.totalorder %s17, 0
      %p58 = por %p56, %p57
      %s60 = sadd.s32 %s59, 1
      %p63 = scmp.eq.s32.totalorder %s11, 1
      %p64 = scmp.ne.s32.totalorder %s59, %s61
      %p65 = scmp.eq.s32.totalorder %s11, 0
      %p66 = por %p64, %p65
      %p67 = scmp.ne.s32.totalorder %s59, %s61
      %p68 = scmp.eq.s32.totalorder %s16, 1
      %p69 = por %p67, %p68
      %p70 = scmp.ne.s32.totalorder %s61, %s62
      %p71 = scmp.eq.s32.totalorder %s16, 0
      %p72 = por %p70, %p71
      %p73 = scmp.ne.s32.totalorder %s61, %s62
      %p74 = scmp.eq.s32.totalorder %s17, 1
      %p75 = por %p73, %p74
      %p77 = scmp.ne.s32.totalorder %s62, %s76
      %p78 = scmp.eq.s32.totalorder %s17, 0
      %p79 = por %p77, %p78
      %s80 = ssub.s32 %s18, %s30
      %p81 = scmp.eq.s32.totalorder %s80, 0
      %s83 = sadd.s32 %s82, 1
      %s84 = scalar_select %p81, %s82, %s83
      %p87 = pneg %p81
      %p88 = scmp.eq.s32.totalorder %s11, 1
      %p89 = por %p87, %p88
      %p90 = scmp.ne.s32.totalorder %s82, %s85
      %p91 = scmp.eq.s32.totalorder %s11, 0
      %p92 = por %p90, %p91
      %p93 = scmp.ne.s32.totalorder %s82, %s85
      %p94 = scmp.eq.s32.totalorder %s16, 1
      %p95 = por %p93, %p94
      %p96 = scmp.ne.s32.totalorder %s85, %s86
      %p97 = scmp.eq.s32.totalorder %s16, 0
      %p98 = por %p96, %p97
      %p99 = scmp.ne.s32.totalorder %s85, %s86
      %p100 = scmp.eq.s32.totalorder %s17, 1
      %p101 = por %p99, %p100
      %p103 = scmp.ne.s32.totalorder %s86, %s102
      %p104 = scmp.eq.s32.totalorder %s17, 0
      %p105 = por %p103, %p104
      %p106 = scmp.le.s32.totalorder 1, %s11
      %p107 = scmp.lt.s32.totalorder %s11, 3
      %p108 = pnand %p106, %p107
      %p109 = pneg %p108
      // Predicated region
      $region9: #{tpu_custom_call.1} parent=5 // pred_check
        _
      $region10: #{tpu_custom_call.1} parent=5 // pred_check_branch
        %111 = sbr.rel (%p108) target = $region12
      $region11: #{tpu_custom_call.1} parent=5 // pred_region
        %s112 = ssub.s32 %s11, 1
        // Predicated region
        $region13: #{tpu_custom_call.1} parent=11 // pred_check
          %p113 = pneg %p72
        $region14: #{tpu_custom_call.1} parent=11 // pred_check_branch
          %115 = sbr.rel (%p113) target = $region16
        $region15: #{tpu_custom_call.1} parent=11 // pred_region
          _
        $region16: #{tpu_custom_call.1} parent=11 // pred_fallthru
          _
      $region12: #{tpu_custom_call.1} parent=5 // pred_fallthru
        _
      %p116 = scmp.lt.s32.totalorder %s11, 2
      // Predicated region
      $region17: #{tpu_custom_call.1} parent=5 // pred_check
        %p117 = pneg %p116
      $region18: #{tpu_custom_call.1} parent=5 // pred_check_branch
        %119 = sbr.rel (%p117) target = $region20
      $region19: #{tpu_custom_call.1} parent=5 // pred_region
        // Predicated region
        $region21: #{tpu_custom_call.1} parent=19 // pred_check
          %p120 = pneg %p45
        $region22: #{tpu_custom_call.1} parent=19 // pred_check_branch
          %122 = sbr.rel (%p120) target = $region24
        $region23: #{tpu_custom_call.1} parent=19 // pred_region
          %s123 = sadd.s32 %s18, %s19
          %s124 = smul.u32 32, %s123
          %p125 = scmp.lt.s32.totalorder %s124, 63
          %s126 = scalar_select %p125, %s124, 63
          %s127 = smul.addr %s126, 2
          %s128 = smul.addr %s127, 4
          %s129 = scalar_lea.vmem %s0, %s128
          %s130 = sadd.s32 %s18, %s19
          %s131 = smul.u32 32, %s130
        $region24: #{tpu_custom_call.1} parent=19 // pred_fallthru
          _
      $region20: #{tpu_custom_call.1} parent=5 // pred_fallthru
        _
      %p132 = scmp.le.s32.totalorder 1, %s11
      %p133 = scmp.lt.s32.totalorder %s11, 3
      %p134 = pnand %p132, %p133
      %p135 = pneg %p134
      // Predicated region
      $region25: #{tpu_custom_call.1} parent=5 // pred_check
        _
      $region26: #{tpu_custom_call.1} parent=5 // pred_check_branch
        %137 = sbr.rel (%p134) target = $region28
      $region27: #{tpu_custom_call.1} parent=5 // pred_region
        %s138 = ssub.s32 %s11, 1
        %s139 = sadd.s32 %s20, %s21
        %s140 = smul.u32 32, %s139
        %p141 = scmp.lt.s32.totalorder %s140, 63
        %s142 = scalar_select %p141, %s140, 63
        %s143 = smul.addr %s142, 2
        %s144 = smul.addr %s143, 4
        %s145 = scalar_lea.vmem %s0, %s144
        %p146 = pneg %p51
        %p147 = pneg %p48
        %p148 = pneg %p72
        %p149 = pneg %p69
        %p150 = pneg %p98
        %p151 = pneg %p95
        %s152 = sand.u32 %s85, 1
        %s153 = scalar_lea.sflag [#allocation4], %s152
        %s154 = sand.u32 %s85, 1
        %s155 = smul.addr %s154, 24
        %s156 = scalar_lea.vmem [#allocation3], %s155
        %s157 = sadd.s32 %s20, %s21
        %s158 = smul.u32 32, %s157
        %p159 = scmp.lt.s32.totalorder %s158, 63
        %s160 = scalar_select %p159, %s158, 63
        %s161 = smul.addr %s160, 2
        %s162 = smul.addr %s161, 4
        %s163 = scalar_lea.vmem %s0, %s162
        %s164 = sadd.s32 %s20, %s21
        %s165 = smul.u32 32, %s164
        %p166 = scmp.eq.s32.totalorder %s21, 0
        // Predicated region
        $region29: #{tpu_custom_call.1} parent=27 // pred_check
          %p167 = pneg %p166
        $region30: #{tpu_custom_call.1} parent=27 // pred_check_branch
          %169 = sbr.rel (%p167) target = $region32
        $region31: #{tpu_custom_call.1} parent=27 // pred_region
          %v170 = vlaneseq
          %vm171 = vcmp.ge.s32.totalorder %v170, 0
          %vm172 = vcmp.lt.s32.totalorder %v170, 258
          %vm173 = vmand %vm171, %vm172
          %174 = vst.msk [vmem:[#allocation2] sm:$0x7] %vm173, 0.0
        $region32: #{tpu_custom_call.1} parent=27 // pred_fallthru
          _
        %v175 = vld [vmem:[%s163] sm:$0xff]
        %v176 = vld [vmem:[%s163 + $0x8] sm:$0xff]
        %v177 = vld [vmem:[%s163 + $0x10] sm:$0xff]
        %v178 = vld [vmem:[%s163 + $0x18] sm:$0xff]
        %v179 = vld [vmem:[%s163 + $0x20] sm:$0xff]
        %v180 = vld [vmem:[%s163 + $0x28] sm:$0xff]
        %v181 = vld [vmem:[%s163 + $0x30] sm:$0xff]
        %v182 = vld [vmem:[%s163 + $0x38] sm:$0xff]
        %v183 = vld [vmem:[%s163 + $0x40] sm:$0xff]
        %v184 = vld [vmem:[%s163 + $0x48] sm:$0xff]
        %v185 = vld [vmem:[%s163 + $0x50] sm:$0xff]
        %v186 = vld [vmem:[%s163 + $0x58] sm:$0xff]
        %v187 = vld [vmem:[%s163 + $0x60] sm:$0xff]
        %v188 = vld [vmem:[%s163 + $0x68] sm:$0xff]
        %v189 = vld [vmem:[%s163 + $0x70] sm:$0xff]
        %v190 = vld [vmem:[%s163 + $0x78] sm:$0xff]
        %v191 = vld [vmem:[%s163 + $0x80] sm:$0xff]
        %v192 = vld [vmem:[%s163 + $0x88] sm:$0xff]
        %v193 = vld [vmem:[%s163 + $0x90] sm:$0xff]
        %v194 = vld [vmem:[%s163 + $0x98] sm:$0xff]
        %v195 = vld [vmem:[%s163 + $0xa0] sm:$0xff]
        %v196 = vld [vmem:[%s163 + $0xa8] sm:$0xff]
        %v197 = vld [vmem:[%s163 + $0xb0] sm:$0xff]
        %v198 = vld [vmem:[%s163 + $0xb8] sm:$0xff]
        %v199 = vld [vmem:[%s163 + $0xc0] sm:$0xff]
        %v200 = vld [vmem:[%s163 + $0xc8] sm:$0xff]
        %v201 = vld [vmem:[%s163 + $0xd0] sm:$0xff]
        %v202 = vld [vmem:[%s163 + $0xd8] sm:$0xff]
        %v203 = vld [vmem:[%s163 + $0xe0] sm:$0xff]
        %v204 = vld [vmem:[%s163 + $0xe8] sm:$0xff]
        %v205 = vld [vmem:[%s163 + $0xf0] sm:$0xff]
        %v206 = vld [vmem:[%s163 + $0xf8] sm:$0xff]
        %v207 = vld [vmem:[%s1] sm:$0xff]
        %v208 = vld [vmem:[%s1 + $0x8] sm:$0xf]
        %v209 = vld [vmem:[%s1 + $0xc] sm:$0xff]
        %v210 = vld [vmem:[%s1 + $0x14] sm:$0xf]
        %v211 = vld [vmem:[%s1 + $0x18] sm:$0xff]
        %v212 = vld [vmem:[%s1 + $0x20] sm:$0xf]
        %v213 = vld [vmem:[%s1 + $0x24] sm:$0xff]
        %v214 = vld [vmem:[%s1 + $0x2c] sm:$0xf]
        %v215 = vld [vmem:[%s1 + $0x30] sm:$0xff]
        %v216 = vld [vmem:[%s1 + $0x38] sm:$0xf]
        %v217 = vld [vmem:[%s1 + $0x3c] sm:$0xff]
        %v218 = vld [vmem:[%s1 + $0x44] sm:$0xf]
        %v219 = vld [vmem:[%s1 + $0x48] sm:$0xff]
        %v220 = vld [vmem:[%s1 + $0x50] sm:$0xf]
        %v221 = vld [vmem:[%s1 + $0x54] sm:$0xff]
        %v222 = vld [vmem:[%s1 + $0x5c] sm:$0xf]
        %v223 = vld [vmem:[%s1 + $0x60] sm:$0xff]
        %v224 = vld [vmem:[%s1 + $0x68] sm:$0xf]
        %v225 = vld [vmem:[%s1 + $0x6c] sm:$0xff]
        %v226 = vld [vmem:[%s1 + $0x74] sm:$0xf]
        %v227 = vld [vmem:[%s1 + $0x78] sm:$0xff]
        %v228 = vld [vmem:[%s1 + $0x80] sm:$0xf]
        %v229 = vld [vmem:[%s1 + $0x84] sm:$0xff]
        %v230 = vld [vmem:[%s1 + $0x8c] sm:$0xf]
        %v231 = vld [vmem:[%s1 + $0x90] sm:$0xff]
        %v232 = vld [vmem:[%s1 + $0x98] sm:$0xf]
        %v233 = vld [vmem:[%s1 + $0x9c] sm:$0xff]
        %v234 = vld [vmem:[%s1 + $0xa4] sm:$0xf]
        %v235 = vld [vmem:[%s1 + $0xa8] sm:$0xff]
        %v236 = vld [vmem:[%s1 + $0xb0] sm:$0xf]
        %v237 = vld [vmem:[%s1 + $0xb4] sm:$0xff]
        %v238 = vld [vmem:[%s1 + $0xbc] sm:$0xf]
        %v239 = vld [vmem:[%s1 + $0xc0] sm:$0xff]
        %v240 = vld [vmem:[%s1 + $0xc8] sm:$0xf]
        %v241 = vld [vmem:[%s1 + $0xcc] sm:$0xff]
        %v242 = vld [vmem:[%s1 + $0xd4] sm:$0xf]
        %v243 = vld [vmem:[%s1 + $0xd8] sm:$0xff]
        %v244 = vld [vmem:[%s1 + $0xe0] sm:$0xf]
        %v245 = vld [vmem:[%s1 + $0xe4] sm:$0xff]
        %v246 = vld [vmem:[%s1 + $0xec] sm:$0xf]
        %v247 = vld [vmem:[%s1 + $0xf0] sm:$0xff]
        %v248 = vld [vmem:[%s1 + $0xf8] sm:$0xf]
        %v249 = vld [vmem:[%s1 + $0xfc] sm:$0xff]
        %v250 = vld [vmem:[%s1 + $0x104] sm:$0xf]
        %v251 = vld [vmem:[%s1 + $0x108] sm:$0xff]
        %v252 = vld [vmem:[%s1 + $0x110] sm:$0xf]
        %v253 = vld [vmem:[%s1 + $0x114] sm:$0xff]
        %v254 = vld [vmem:[%s1 + $0x11c] sm:$0xf]
        %v255 = vld [vmem:[%s1 + $0x120] sm:$0xff]
        %v256 = vld [vmem:[%s1 + $0x128] sm:$0xf]
        %v257 = vld [vmem:[%s1 + $0x12c] sm:$0xff]
        %v258 = vld [vmem:[%s1 + $0x134] sm:$0xf]
        %v259 = vld [vmem:[%s1 + $0x138] sm:$0xff]
        %v260 = vld [vmem:[%s1 + $0x140] sm:$0xf]
        %v261 = vld [vmem:[%s1 + $0x144] sm:$0xff]
        %v262 = vld [vmem:[%s1 + $0x14c] sm:$0xf]
        %v263 = vld [vmem:[%s1 + $0x150] sm:$0xff]
        %v264 = vld [vmem:[%s1 + $0x158] sm:$0xf]
        %v265 = vld [vmem:[%s1 + $0x15c] sm:$0xff]
        %v266 = vld [vmem:[%s1 + $0x164] sm:$0xf]
        %v267 = vld [vmem:[%s1 + $0x168] sm:$0xff]
        %v268 = vld [vmem:[%s1 + $0x170] sm:$0xf]
        %v269 = vld [vmem:[%s1 + $0x174] sm:$0xff]
        %v270 = vld [vmem:[%s1 + $0x17c] sm:$0xf]
        %v303 = vunpack.c.l.b16 %v175
        %v304 = vunpack.c.h.b16 %v175
        %v305 = vunpack.c.l.b16 %v176
        %v306 = vunpack.c.h.b16 %v176
        %v307 = vunpack.c.l.b16 %v177
        %v308 = vunpack.c.h.b16 %v177
        %v309 = vunpack.c.l.b16 %v178
        %v310 = vunpack.c.h.b16 %v178
        %v311 = vunpack.c.l.b16 %v179
        %v312 = vunpack.c.h.b16 %v179
        %v313 = vunpack.c.l.b16 %v180
        %v314 = vunpack.c.h.b16 %v180
        %v315 = vunpack.c.l.b16 %v181
        %v316 = vunpack.c.h.b16 %v181
        %v317 = vunpack.c.l.b16 %v182
        %v318 = vunpack.c.h.b16 %v182
        %v319 = vunpack.c.l.b16 %v183
        %v320 = vunpack.c.h.b16 %v183
        %v321 = vunpack.c.l.b16 %v184
        %v322 = vunpack.c.h.b16 %v184
        %v323 = vunpack.c.l.b16 %v185
        %v324 = vunpack.c.h.b16 %v185
        %v325 = vunpack.c.l.b16 %v186
        %v326 = vunpack.c.h.b16 %v186
        %v327 = vunpack.c.l.b16 %v187
        %v328 = vunpack.c.h.b16 %v187
        %v329 = vunpack.c.l.b16 %v188
        %v330 = vunpack.c.h.b16 %v188
        %v331 = vunpack.c.l.b16 %v189
        %v332 = vunpack.c.h.b16 %v189
        %v333 = vunpack.c.l.b16 %v190
        %v334 = vunpack.c.h.b16 %v190
        %v335 = vunpack.c.l.b16 %v191
        %v336 = vunpack.c.h.b16 %v191
        %v337 = vunpack.c.l.b16 %v192
        %v338 = vunpack.c.h.b16 %v192
        %v339 = vunpack.c.l.b16 %v193
        %v340 = vunpack.c.h.b16 %v193
        %v341 = vunpack.c.l.b16 %v194
        %v342 = vunpack.c.h.b16 %v194
        %v343 = vunpack.c.l.b16 %v195
        %v344 = vunpack.c.h.b16 %v195
        %v345 = vunpack.c.l.b16 %v196
        %v346 = vunpack.c.h.b16 %v196
        %v347 = vunpack.c.l.b16 %v197
        %v348 = vunpack.c.h.b16 %v197
        %v349 = vunpack.c.l.b16 %v198
        %v350 = vunpack.c.h.b16 %v198
        %v351 = vunpack.c.l.b16 %v199
        %v352 = vunpack.c.h.b16 %v199
        %v353 = vunpack.c.l.b16 %v200
        %v354 = vunpack.c.h.b16 %v200
        %v355 = vunpack.c.l.b16 %v201
        %v356 = vunpack.c.h.b16 %v201
        %v357 = vunpack.c.l.b16 %v202
        %v358 = vunpack.c.h.b16 %v202
        %v359 = vunpack.c.l.b16 %v203
        %v360 = vunpack.c.h.b16 %v203
        %v361 = vunpack.c.l.b16 %v204
        %v362 = vunpack.c.h.b16 %v204
        %v363 = vunpack.c.l.b16 %v205
        %v364 = vunpack.c.h.b16 %v205
        %v365 = vunpack.c.l.b16 %v206
        %v366 = vunpack.c.h.b16 %v206
        %v367 = vpack.c.b16 %v305, %v303
        %v368 = vpack.c.b16 %v306, %v304
        %v369 = vpack.c.b16 %v309, %v307
        %v370 = vpack.c.b16 %v310, %v308
        %v371 = vpack.c.b16 %v313, %v311
        %v372 = vpack.c.b16 %v314, %v312
        %v373 = vpack.c.b16 %v317, %v315
        %v374 = vpack.c.b16 %v318, %v316
        %v375 = vpack.c.b16 %v321, %v319
        %v376 = vpack.c.b16 %v322, %v320
        %v377 = vpack.c.b16 %v325, %v323
        %v378 = vpack.c.b16 %v326, %v324
        %v379 = vpack.c.b16 %v329, %v327
        %v380 = vpack.c.b16 %v330, %v328
        %v381 = vpack.c.b16 %v333, %v331
        %v382 = vpack.c.b16 %v334, %v332
        %v383 = vpack.c.b16 %v337, %v335
        %v384 = vpack.c.b16 %v338, %v336
        %v385 = vpack.c.b16 %v341, %v339
        %v386 = vpack.c.b16 %v342, %v340
        %v387 = vpack.c.b16 %v345, %v343
        %v388 = vpack.c.b16 %v346, %v344
        %v389 = vpack.c.b16 %v349, %v347
        %v390 = vpack.c.b16 %v350, %v348
        %v391 = vpack.c.b16 %v353, %v351
        %v392 = vpack.c.b16 %v354, %v352
        %v393 = vpack.c.b16 %v357, %v355
        %v394 = vpack.c.b16 %v358, %v356
        %v395 = vpack.c.b16 %v361, %v359
        %v396 = vpack.c.b16 %v362, %v360
        %v397 = vpack.c.b16 %v365, %v363
        %v398 = vpack.c.b16 %v366, %v364
        %v495 = vunpack.c.l.b16 %v207
        %v496 = vunpack.c.h.b16 %v207
        %v497 = vunpack.c.l.b16 %v208
        %v498 = vunpack.c.l.b16 %v209
        %v499 = vunpack.c.h.b16 %v209
        %v500 = vunpack.c.l.b16 %v210
        %v501 = vunpack.c.l.b16 %v211
        %v502 = vunpack.c.h.b16 %v211
        %v503 = vunpack.c.l.b16 %v212
        %v504 = vunpack.c.l.b16 %v213
        %v505 = vunpack.c.h.b16 %v213
        %v506 = vunpack.c.l.b16 %v214
        %v507 = vunpack.c.l.b16 %v215
        %v508 = vunpack.c.h.b16 %v215
        %v509 = vunpack.c.l.b16 %v216
        %v510 = vunpack.c.l.b16 %v217
        %v511 = vunpack.c.h.b16 %v217
        %v512 = vunpack.c.l.b16 %v218
        %v513 = vunpack.c.l.b16 %v219
        %v514 = vunpack.c.h.b16 %v219
        %v515 = vunpack.c.l.b16 %v220
        %v516 = vunpack.c.l.b16 %v221
        %v517 = vunpack.c.h.b16 %v221
        %v518 = vunpack.c.l.b16 %v222
        %v519 = vunpack.c.l.b16 %v223
        %v520 = vunpack.c.h.b16 %v223
        %v521 = vunpack.c.l.b16 %v224
        %v522 = vunpack.c.l.b16 %v225
        %v523 = vunpack.c.h.b16 %v225
        %v524 = vunpack.c.l.b16 %v226
        %v525 = vunpack.c.l.b16 %v227
        %v526 = vunpack.c.h.b16 %v227
        %v527 = vunpack.c.l.b16 %v228
        %v528 = vunpack.c.l.b16 %v229
        %v529 = vunpack.c.h.b16 %v229
        %v530 = vunpack.c.l.b16 %v230
        %v531 = vunpack.c.l.b16 %v231
        %v532 = vunpack.c.h.b16 %v231
        %v533 = vunpack.c.l.b16 %v232
        %v534 = vunpack.c.l.b16 %v233
        %v535 = vunpack.c.h.b16 %v233
        %v536 = vunpack.c.l.b16 %v234
        %v537 = vunpack.c.l.b16 %v235
        %v538 = vunpack.c.h.b16 %v235
        %v539 = vunpack.c.l.b16 %v236
        %v540 = vunpack.c.l.b16 %v237
        %v541 = vunpack.c.h.b16 %v237
        %v542 = vunpack.c.l.b16 %v238
        %v543 = vunpack.c.l.b16 %v239
        %v544 = vunpack.c.h.b16 %v239
        %v545 = vunpack.c.l.b16 %v240
        %v546 = vunpack.c.l.b16 %v241
        %v547 = vunpack.c.h.b16 %v241
        %v548 = vunpack.c.l.b16 %v242
        %v549 = vunpack.c.l.b16 %v243
        %v550 = vunpack.c.h.b16 %v243
        %v551 = vunpack.c.l.b16 %v244
        %v552 = vunpack.c.l.b16 %v245
        %v553 = vunpack.c.h.b16 %v245
        %v554 = vunpack.c.l.b16 %v246
        %v555 = vunpack.c.l.b16 %v247
        %v556 = vunpack.c.h.b16 %v247
        %v557 = vunpack.c.l.b16 %v248
        %v558 = vunpack.c.l.b16 %v249
        %v559 = vunpack.c.h.b16 %v249
        %v560 = vunpack.c.l.b16 %v250
        %v561 = vunpack.c.l.b16 %v251
        %v562 = vunpack.c.h.b16 %v251
        %v563 = vunpack.c.l.b16 %v252
        %v564 = vunpack.c.l.b16 %v253
        %v565 = vunpack.c.h.b16 %v253
        %v566 = vunpack.c.l.b16 %v254
        %v567 = vunpack.c.l.b16 %v255
        %v568 = vunpack.c.h.b16 %v255
        %v569 = vunpack.c.l.b16 %v256
        %v570 = vunpack.c.l.b16 %v257
        %v571 = vunpack.c.h.b16 %v257
        %v572 = vunpack.c.l.b16 %v258
        %v573 = vunpack.c.l.b16 %v259
        %v574 = vunpack.c.h.b16 %v259
        %v575 = vunpack.c.l.b16 %v260
        %v576 = vunpack.c.l.b16 %v261
        %v577 = vunpack.c.h.b16 %v261
        %v578 = vunpack.c.l.b16 %v262
        %v579 = vunpack.c.l.b16 %v263
        %v580 = vunpack.c.h.b16 %v263
        %v581 = vunpack.c.l.b16 %v264
        %v582 = vunpack.c.l.b16 %v265
        %v583 = vunpack.c.h.b16 %v265
        %v584 = vunpack.c.l.b16 %v266
        %v585 = vunpack.c.l.b16 %v267
        %v586 = vunpack.c.h.b16 %v267
        %v587 = vunpack.c.l.b16 %v268
        %v588 = vunpack.c.l.b16 %v269
        %v589 = vunpack.c.h.b16 %v269
        %v590 = vunpack.c.l.b16 %v270
        %v591 = vpack.c.b16 %v498, %v495
        %v592 = vpack.c.b16 %v499, %v496
        %v593 = vpack.c.b16 %v500, %v497
        %v594 = vpack.c.b16 %v504, %v501
        %v595 = vpack.c.b16 %v505, %v502
        %v596 = vpack.c.b16 %v506, %v503
        %v597 = vpack.c.b16 %v510, %v507
        %v598 = vpack.c.b16 %v511, %v508
        %v599 = vpack.c.b16 %v512, %v509
        %v600 = vpack.c.b16 %v516, %v513
        %v601 = vpack.c.b16 %v517, %v514
        %v602 = vpack.c.b16 %v518, %v515
        %v603 = vpack.c.b16 %v522, %v519
        %v604 = vpack.c.b16 %v523, %v520
        %v605 = vpack.c.b16 %v524, %v521
        %v606 = vpack.c.b16 %v528, %v525
        %v607 = vpack.c.b16 %v529, %v526
        %v608 = vpack.c.b16 %v530, %v527
        %v609 = vpack.c.b16 %v534, %v531
        %v610 = vpack.c.b16 %v535, %v532
        %v611 = vpack.c.b16 %v536, %v533
        %v612 = vpack.c.b16 %v540, %v537
        %v613 = vpack.c.b16 %v541, %v538
        %v614 = vpack.c.b16 %v542, %v539
        %v615 = vpack.c.b16 %v546, %v543
        %v616 = vpack.c.b16 %v547, %v544
        %v617 = vpack.c.b16 %v548, %v545
        %v618 = vpack.c.b16 %v552, %v549
        %v619 = vpack.c.b16 %v553, %v550
        %v620 = vpack.c.b16 %v554, %v551
        %v621 = vpack.c.b16 %v558, %v555
        %v622 = vpack.c.b16 %v559, %v556
        %v623 = vpack.c.b16 %v560, %v557
        %v624 = vpack.c.b16 %v564, %v561
        %v625 = vpack.c.b16 %v565, %v562
        %v626 = vpack.c.b16 %v566, %v563
        %v627 = vpack.c.b16 %v570, %v567
        %v628 = vpack.c.b16 %v571, %v568
        %v629 = vpack.c.b16 %v572, %v569
        %v630 = vpack.c.b16 %v576, %v573
        %v631 = vpack.c.b16 %v577, %v574
        %v632 = vpack.c.b16 %v578, %v575
        %v633 = vpack.c.b16 %v582, %v579
        %v634 = vpack.c.b16 %v583, %v580
        %v635 = vpack.c.b16 %v584, %v581
        %v636 = vpack.c.b16 %v588, %v585
        %v637 = vpack.c.b16 %v589, %v586
        %v638 = vpack.c.b16 %v590, %v587
        %687 = vmatpush.bf16.msra.mxu0 %v612
        %688 = vmatpush.bf16.msra.mxu0 %v609
        %689 = vmatpush.bf16.msra.mxu0 %v606
        %690 = vmatpush.bf16.msra.mxu0 %v603
        %691 = vmatpush.bf16.msra.mxu0 %v600
        %692 = vmatpush.bf16.msra.mxu0 %v597
        %693 = vmatpush.bf16.msra.mxu0 %v594
        %694 = vmatpush.bf16.msra.mxu0 %v591
        %695 = vmatmul.bf16.gmra.mxu0 %v367
        %v696 = vpop.f32.mrf.mxu0
        %v697 = vadd.f32 0.0, %v696
        %v698 = vpop.f32.mrf.mxu0
        %v699 = vadd.f32 0.0, %v698
        %700 = vmatmul.bf16.gmra.mxu0 %v369
        %v701 = vpop.f32.mrf.mxu0
        %v702 = vadd.f32 0.0, %v701
        %v703 = vpop.f32.mrf.mxu0
        %v704 = vadd.f32 0.0, %v703
        %705 = vmatmul.bf16.gmra.mxu0 %v371
        %v706 = vpop.f32.mrf.mxu0
        %v707 = vadd.f32 0.0, %v706
        %v708 = vpop.f32.mrf.mxu0
        %v709 = vadd.f32 0.0, %v708
        %710 = vmatmul.bf16.gmra.mxu0 %v373
        %v711 = vpop.f32.mrf.mxu0
        %v712 = vadd.f32 0.0, %v711
        %v713 = vpop.f32.mrf.mxu0
        %v714 = vadd.f32 0.0, %v713
        %715 = vmatmul.bf16.gmra.mxu0 %v375
        %v716 = vpop.f32.mrf.mxu0
        %v717 = vadd.f32 0.0, %v716
        %v718 = vpop.f32.mrf.mxu0
        %v719 = vadd.f32 0.0, %v718
        %720 = vmatmul.bf16.gmra.mxu0 %v377
        %v721 = vpop.f32.mrf.mxu0
        %v722 = vadd.f32 0.0, %v721
        %v723 = vpop.f32.mrf.mxu0
        %v724 = vadd.f32 0.0, %v723
        %725 = vmatmul.bf16.gmra.mxu0 %v379
        %v726 = vpop.f32.mrf.mxu0
        %v727 = vadd.f32 0.0, %v726
        %v728 = vpop.f32.mrf.mxu0
        %v729 = vadd.f32 0.0, %v728
        %730 = vmatmul.bf16.gmra.mxu0 %v381
        %v731 = vpop.f32.mrf.mxu0
        %v732 = vadd.f32 0.0, %v731
        %v733 = vpop.f32.mrf.mxu0
        %v734 = vadd.f32 0.0, %v733
        %735 = vmatmul.bf16.gmra.mxu0 %v383
        %v736 = vpop.f32.mrf.mxu0
        %v737 = vadd.f32 0.0, %v736
        %v738 = vpop.f32.mrf.mxu0
        %v739 = vadd.f32 0.0, %v738
        %740 = vmatmul.bf16.gmra.mxu0 %v385
        %v741 = vpop.f32.mrf.mxu0
        %v742 = vadd.f32 0.0, %v741
        %v743 = vpop.f32.mrf.mxu0
        %v744 = vadd.f32 0.0, %v743
        %745 = vmatmul.bf16.gmra.mxu0 %v387
        %v746 = vpop.f32.mrf.mxu0
        %v747 = vadd.f32 0.0, %v746
        %v748 = vpop.f32.mrf.mxu0
        %v749 = vadd.f32 0.0, %v748
        %750 = vmatmul.bf16.gmra.mxu0 %v389
        %v751 = vpop.f32.mrf.mxu0
        %v752 = vadd.f32 0.0, %v751
        %v753 = vpop.f32.mrf.mxu0
        %v754 = vadd.f32 0.0, %v753
        %755 = vmatmul.bf16.gmra.mxu0 %v391
        %v756 = vpop.f32.mrf.mxu0
        %v757 = vadd.f32 0.0, %v756
        %v758 = vpop.f32.mrf.mxu0
        %v759 = vadd.f32 0.0, %v758
        %760 = vmatmul.bf16.gmra.mxu0 %v393
        %v761 = vpop.f32.mrf.mxu0
        %v762 = vadd.f32 0.0, %v761
        %v763 = vpop.f32.mrf.mxu0
        %v764 = vadd.f32 0.0, %v763
        %765 = vmatmul.bf16.gmra.mxu0 %v395
        %v766 = vpop.f32.mrf.mxu0
        %v767 = vadd.f32 0.0, %v766
        %v768 = vpop.f32.mrf.mxu0
        %v769 = vadd.f32 0.0, %v768
        %770 = vmatmul.bf16.gmra.mxu0 %v397
        %v771 = vpop.f32.mrf.mxu0
        %v772 = vadd.f32 0.0, %v771
        %v773 = vpop.f32.mrf.mxu0
        %v774 = vadd.f32 0.0, %v773
        %775 = vdwg.mxu0
        %776 = vmatpush.bf16.msra.mxu0 %v636
        %777 = vmatpush.bf16.msra.mxu0 %v633
        %778 = vmatpush.bf16.msra.mxu0 %v630
        %779 = vmatpush.bf16.msra.mxu0 %v627
        %780 = vmatpush.bf16.msra.mxu0 %v624
        %781 = vmatpush.bf16.msra.mxu0 %v621
        %782 = vmatpush.bf16.msra.mxu0 %v618
        %783 = vmatpush.bf16.msra.mxu0 %v615
        %784 = vmatmul.bf16.gmra.mxu0 %v368
        %v785 = vpop.f32.mrf.mxu0
        %v786 = vadd.f32 %v697, %v785
        %v787 = vpop.f32.mrf.mxu0
        %v788 = vadd.f32 %v699, %v787
        %789 = vmatmul.bf16.gmra.mxu0 %v370
        %v790 = vpop.f32.mrf.mxu0
        %v791 = vadd.f32 %v702, %v790
        %v792 = vpop.f32.mrf.mxu0
        %v793 = vadd.f32 %v704, %v792
        %794 = vmatmul.bf16.gmra.mxu0 %v372
        %v795 = vpop.f32.mrf.mxu0
        %v796 = vadd.f32 %v707, %v795
        %v797 = vpop.f32.mrf.mxu0
        %v798 = vadd.f32 %v709, %v797
        %799 = vmatmul.bf16.gmra.mxu0 %v374
        %v800 = vpop.f32.mrf.mxu0
        %v801 = vadd.f32 %v712, %v800
        %v802 = vpop.f32.mrf.mxu0
        %v803 = vadd.f32 %v714, %v802
        %804 = vmatmul.bf16.gmra.mxu0 %v376
        %v805 = vpop.f32.mrf.mxu0
        %v806 = vadd.f32 %v717, %v805
        %v807 = vpop.f32.mrf.mxu0
        %v808 = vadd.f32 %v719, %v807
        %809 = vmatmul.bf16.gmra.mxu0 %v378
        %v810 = vpop.f32.mrf.mxu0
        %v811 = vadd.f32 %v722, %v810
        %v812 = vpop.f32.mrf.mxu0
        %v813 = vadd.f32 %v724, %v812
        %814 = vmatmul.bf16.gmra.mxu0 %v380
        %v815 = vpop.f32.mrf.mxu0
        %v816 = vadd.f32 %v727, %v815
        %v817 = vpop.f32.mrf.mxu0
        %v818 = vadd.f32 %v729, %v817
        %819 = vmatmul.bf16.gmra.mxu0 %v382
        %v820 = vpop.f32.mrf.mxu0
        %v821 = vadd.f32 %v732, %v820
        %v822 = vpop.f32.mrf.mxu0
        %v823 = vadd.f32 %v734, %v822
        %824 = vmatmul.bf16.gmra.mxu0 %v384
        %v825 = vpop.f32.mrf.mxu0
        %v826 = vadd.f32 %v737, %v825
        %v827 = vpop.f32.mrf.mxu0
        %v828 = vadd.f32 %v739, %v827
        %829 = vmatmul.bf16.gmra.mxu0 %v386
        %v830 = vpop.f32.mrf.mxu0
        %v831 = vadd.f32 %v742, %v830
        %v832 = vpop.f32.mrf.mxu0
        %v833 = vadd.f32 %v744, %v832
        %834 = vmatmul.bf16.gmra.mxu0 %v388
        %v835 = vpop.f32.mrf.mxu0
        %v836 = vadd.f32 %v747, %v835
        %v837 = vpop.f32.mrf.mxu0
        %v838 = vadd.f32 %v749, %v837
        %839 = vmatmul.bf16.gmra.mxu0 %v390
        %v840 = vpop.f32.mrf.mxu0
        %v841 = vadd.f32 %v752, %v840
        %v842 = vpop.f32.mrf.mxu0
        %v843 = vadd.f32 %v754, %v842
        %844 = vmatmul.bf16.gmra.mxu0 %v392
        %v845 = vpop.f32.mrf.mxu0
        %v846 = vadd.f32 %v757, %v845
        %v847 = vpop.f32.mrf.mxu0
        %v848 = vadd.f32 %v759, %v847
        %849 = vmatmul.bf16.gmra.mxu0 %v394
        %v850 = vpop.f32.mrf.mxu0
        %v851 = vadd.f32 %v762, %v850
        %v852 = vpop.f32.mrf.mxu0
        %v853 = vadd.f32 %v764, %v852
        %854 = vmatmul.bf16.gmra.mxu0 %v396
        %v855 = vpop.f32.mrf.mxu0
        %v856 = vadd.f32 %v767, %v855
        %v857 = vpop.f32.mrf.mxu0
        %v858 = vadd.f32 %v769, %v857
        %859 = vmatmul.bf16.gmra.mxu0 %v398
        %v860 = vpop.f32.mrf.mxu0
        %v861 = vadd.f32 %v772, %v860
        %v862 = vpop.f32.mrf.mxu0
        %v863 = vadd.f32 %v774, %v862
        %864 = vdwg.mxu0
        %865 = vmatpush.bf16.msra.mxu0 %v613
        %866 = vmatpush.bf16.msra.mxu0 %v610
        %867 = vmatpush.bf16.msra.mxu0 %v607
        %868 = vmatpush.bf16.msra.mxu0 %v604
        %869 = vmatpush.bf16.msra.mxu0 %v601
        %870 = vmatpush.bf16.msra.mxu0 %v598
        %871 = vmatpush.bf16.msra.mxu0 %v595
        %872 = vmatpush.bf16.msra.mxu0 %v592
        %873 = vmatmul.bf16.gmra.mxu0 %v367
        %v874 = vpop.f32.mrf.mxu0
        %v875 = vadd.f32 0.0, %v874
        %v876 = vpop.f32.mrf.mxu0
        %v877 = vadd.f32 0.0, %v876
        %878 = vmatmul.bf16.gmra.mxu0 %v369
        %v879 = vpop.f32.mrf.mxu0
        %v880 = vadd.f32 0.0, %v879
        %v881 = vpop.f32.mrf.mxu0
        %v882 = vadd.f32 0.0, %v881
        %883 = vmatmul.bf16.gmra.mxu0 %v371
        %v884 = vpop.f32.mrf.mxu0
        %v885 = vadd.f32 0.0, %v884
        %v886 = vpop.f32.mrf.mxu0
        %v887 = vadd.f32 0.0, %v886
        %888 = vmatmul.bf16.gmra.mxu0 %v373
        %v889 = vpop.f32.mrf.mxu0
        %v890 = vadd.f32 0.0, %v889
        %v891 = vpop.f32.mrf.mxu0
        %v892 = vadd.f32 0.0, %v891
        %893 = vmatmul.bf16.gmra.mxu0 %v375
        %v894 = vpop.f32.mrf.mxu0
        %v895 = vadd.f32 0.0, %v894
        %v896 = vpop.f32.mrf.mxu0
        %v897 = vadd.f32 0.0, %v896
        %898 = vmatmul.bf16.gmra.mxu0 %v377
        %v899 = vpop.f32.mrf.mxu0
        %v900 = vadd.f32 0.0, %v899
        %v901 = vpop.f32.mrf.mxu0
        %v902 = vadd.f32 0.0, %v901
        %903 = vmatmul.bf16.gmra.mxu0 %v379
        %v904 = vpop.f32.mrf.mxu0
        %v905 = vadd.f32 0.0, %v904
        %v906 = vpop.f32.mrf.mxu0
        %v907 = vadd.f32 0.0, %v906
        %908 = vmatmul.bf16.gmra.mxu0 %v381
        %v909 = vpop.f32.mrf.mxu0
        %v910 = vadd.f32 0.0, %v909
        %v911 = vpop.f32.mrf.mxu0
        %v912 = vadd.f32 0.0, %v911
        %913 = vmatmul.bf16.gmra.mxu0 %v383
        %v914 = vpop.f32.mrf.mxu0
        %v915 = vadd.f32 0.0, %v914
        %v916 = vpop.f32.mrf.mxu0
        %v917 = vadd.f32 0.0, %v916
        %918 = vmatmul.bf16.gmra.mxu0 %v385
        %v919 = vpop.f32.mrf.mxu0
        %v920 = vadd.f32 0.0, %v919
        %v921 = vpop.f32.mrf.mxu0
        %v922 = vadd.f32 0.0, %v921
        %923 = vmatmul.bf16.gmra.mxu0 %v387
        %v924 = vpop.f32.mrf.mxu0
        %v925 = vadd.f32 0.0, %v924
        %v926 = vpop.f32.mrf.mxu0
        %v927 = vadd.f32 0.0, %v926
        %928 = vmatmul.bf16.gmra.mxu0 %v389
        %v929 = vpop.f32.mrf.mxu0
        %v930 = vadd.f32 0.0, %v929
        %v931 = vpop.f32.mrf.mxu0
        %v932 = vadd.f32 0.0, %v931
        %933 = vmatmul.bf16.gmra.mxu0 %v391
        %v934 = vpop.f32.mrf.mxu0
        %v935 = vadd.f32 0.0, %v934
        %v936 = vpop.f32.mrf.mxu0
        %v937 = vadd.f32 0.0, %v936
        %938 = vmatmul.bf16.gmra.mxu0 %v393
        %v939 = vpop.f32.mrf.mxu0
        %v940 = vadd.f32 0.0, %v939
        %v941 = vpop.f32.mrf.mxu0
        %v942 = vadd.f32 0.0, %v941
        %943 = vmatmul.bf16.gmra.mxu0 %v395
        %v944 = vpop.f32.mrf.mxu0
        %v945 = vadd.f32 0.0, %v944
        %v946 = vpop.f32.mrf.mxu0
        %v947 = vadd.f32 0.0, %v946
        %948 = vmatmul.bf16.gmra.mxu0 %v397
        %v949 = vpop.f32.mrf.mxu0
        %v950 = vadd.f32 0.0, %v949
        %v951 = vpop.f32.mrf.mxu0
        %v952 = vadd.f32 0.0, %v951
        %953 = vdwg.mxu0
        %954 = vmatpush.bf16.msra.mxu0 %v637
        %955 = vmatpush.bf16.msra.mxu0 %v634
        %956 = vmatpush.bf16.msra.mxu0 %v631
        %957 = vmatpush.bf16.msra.mxu0 %v628
        %958 = vmatpush.bf16.msra.mxu0 %v625
        %959 = vmatpush.bf16.msra.mxu0 %v622
        %960 = vmatpush.bf16.msra.mxu0 %v619
        %961 = vmatpush.bf16.msra.mxu0 %v616
        %962 = vmatmul.bf16.gmra.mxu0 %v368
        %v963 = vpop.f32.mrf.mxu0
        %v964 = vadd.f32 %v875, %v963
        %v965 = vpop.f32.mrf.mxu0
        %v966 = vadd.f32 %v877, %v965
        %967 = vmatmul.bf16.gmra.mxu0 %v370
        %v968 = vpop.f32.mrf.mxu0
        %v969 = vadd.f32 %v880, %v968
        %v970 = vpop.f32.mrf.mxu0
        %v971 = vadd.f32 %v882, %v970
        %972 = vmatmul.bf16.gmra.mxu0 %v372
        %v973 = vpop.f32.mrf.mxu0
        %v974 = vadd.f32 %v885, %v973
        %v975 = vpop.f32.mrf.mxu0
        %v976 = vadd.f32 %v887, %v975
        %977 = vmatmul.bf16.gmra.mxu0 %v374
        %v978 = vpop.f32.mrf.mxu0
        %v979 = vadd.f32 %v890, %v978
        %v980 = vpop.f32.mrf.mxu0
        %v981 = vadd.f32 %v892, %v980
        %982 = vmatmul.bf16.gmra.mxu0 %v376
        %v983 = vpop.f32.mrf.mxu0
        %v984 = vadd.f32 %v895, %v983
        %v985 = vpop.f32.mrf.mxu0
        %v986 = vadd.f32 %v897, %v985
        %987 = vmatmul.bf16.gmra.mxu0 %v378
        %v988 = vpop.f32.mrf.mxu0
        %v989 = vadd.f32 %v900, %v988
        %v990 = vpop.f32.mrf.mxu0
        %v991 = vadd.f32 %v902, %v990
        %992 = vmatmul.bf16.gmra.mxu0 %v380
        %v993 = vpop.f32.mrf.mxu0
        %v994 = vadd.f32 %v905, %v993
        %v995 = vpop.f32.mrf.mxu0
        %v996 = vadd.f32 %v907, %v995
        %997 = vmatmul.bf16.gmra.mxu0 %v382
        %v998 = vpop.f32.mrf.mxu0
        %v999 = vadd.f32 %v910, %v998
        %v1000 = vpop.f32.mrf.mxu0
        %v1001 = vadd.f32 %v912, %v1000
        %1002 = vmatmul.bf16.gmra.mxu0 %v384
        %v1003 = vpop.f32.mrf.mxu0
        %v1004 = vadd.f32 %v915, %v1003
        %v1005 = vpop.f32.mrf.mxu0
        %v1006 = vadd.f32 %v917, %v1005
        %1007 = vmatmul.bf16.gmra.mxu0 %v386
        %v1008 = vpop.f32.mrf.mxu0
        %v1009 = vadd.f32 %v920, %v1008
        %v1010 = vpop.f32.mrf.mxu0
        %v1011 = vadd.f32 %v922, %v1010
        %1012 = vmatmul.bf16.gmra.mxu0 %v388
        %v1013 = vpop.f32.mrf.mxu0
        %v1014 = vadd.f32 %v925, %v1013
        %v1015 = vpop.f32.mrf.mxu0
        %v1016 = vadd.f32 %v927, %v1015
        %1017 = vmatmul.bf16.gmra.mxu0 %v390
        %v1018 = vpop.f32.mrf.mxu0
        %v1019 = vadd.f32 %v930, %v1018
        %v1020 = vpop.f32.mrf.mxu0
        %v1021 = vadd.f32 %v932, %v1020
        %1022 = vmatmul.bf16.gmra.mxu0 %v392
        %v1023 = vpop.f32.mrf.mxu0
        %v1024 = vadd.f32 %v935, %v1023
        %v1025 = vpop.f32.mrf.mxu0
        %v1026 = vadd.f32 %v937, %v1025
        %1027 = vmatmul.bf16.gmra.mxu0 %v394
        %v1028 = vpop.f32.mrf.mxu0
        %v1029 = vadd.f32 %v940, %v1028
        %v1030 = vpop.f32.mrf.mxu0
        %v1031 = vadd.f32 %v942, %v1030
        %1032 = vmatmul.bf16.gmra.mxu0 %v396
        %v1033 = vpop.f32.mrf.mxu0
        %v1034 = vadd.f32 %v945, %v1033
        %v1035 = vpop.f32.mrf.mxu0
        %v1036 = vadd.f32 %v947, %v1035
        %1037 = vmatmul.bf16.gmra.mxu0 %v398
        %v1038 = vpop.f32.mrf.mxu0
        %v1039 = vadd.f32 %v950, %v1038
        %v1040 = vpop.f32.mrf.mxu0
        %v1041 = vadd.f32 %v952, %v1040
        %1042 = vdwg.mxu0
        %1043 = vmatpush.bf16.msra.mxu0 %v614
        %1044 = vmatpush.bf16.msra.mxu0 %v611
        %1045 = vmatpush.bf16.msra.mxu0 %v608
        %1046 = vmatpush.bf16.msra.mxu0 %v605
        %1047 = vmatpush.bf16.msra.mxu0 %v602
        %1048 = vmatpush.bf16.msra.mxu0 %v599
        %1049 = vmatpush.bf16.msra.mxu0 %v596
        %1050 = vmatpush.bf16.msra.mxu0 %v593
        %1051 = vmatmul.bf16.gmra.mxu0 %v367
        %v1052 = vpop.f32.mrf.mxu0
        %v1053 = vadd.f32 0.0, %v1052
        %v1054 = vpop.f32.mrf.mxu0
        %v1055 = vadd.f32 0.0, %v1054
        %1056 = vmatmul.bf16.gmra.mxu0 %v369
        %v1057 = vpop.f32.mrf.mxu0
        %v1058 = vadd.f32 0.0, %v1057
        %v1059 = vpop.f32.mrf.mxu0
        %v1060 = vadd.f32 0.0, %v1059
        %1061 = vmatmul.bf16.gmra.mxu0 %v371
        %v1062 = vpop.f32.mrf.mxu0
        %v1063 = vadd.f32 0.0, %v1062
        %v1064 = vpop.f32.mrf.mxu0
        %v1065 = vadd.f32 0.0, %v1064
        %1066 = vmatmul.bf16.gmra.mxu0 %v373
        %v1067 = vpop.f32.mrf.mxu0
        %v1068 = vadd.f32 0.0, %v1067
        %v1069 = vpop.f32.mrf.mxu0
        %v1070 = vadd.f32 0.0, %v1069
        %1071 = vmatmul.bf16.gmra.mxu0 %v375
        %v1072 = vpop.f32.mrf.mxu0
        %v1073 = vadd.f32 0.0, %v1072
        %v1074 = vpop.f32.mrf.mxu0
        %v1075 = vadd.f32 0.0, %v1074
        %1076 = vmatmul.bf16.gmra.mxu0 %v377
        %v1077 = vpop.f32.mrf.mxu0
        %v1078 = vadd.f32 0.0, %v1077
        %v1079 = vpop.f32.mrf.mxu0
        %v1080 = vadd.f32 0.0, %v1079
        %1081 = vmatmul.bf16.gmra.mxu0 %v379
        %v1082 = vpop.f32.mrf.mxu0
        %v1083 = vadd.f32 0.0, %v1082
        %v1084 = vpop.f32.mrf.mxu0
        %v1085 = vadd.f32 0.0, %v1084
        %1086 = vmatmul.bf16.gmra.mxu0 %v381
        %v1087 = vpop.f32.mrf.mxu0
        %v1088 = vadd.f32 0.0, %v1087
        %v1089 = vpop.f32.mrf.mxu0
        %v1090 = vadd.f32 0.0, %v1089
        %1091 = vmatmul.bf16.gmra.mxu0 %v383
        %v1092 = vpop.f32.mrf.mxu0
        %v1093 = vadd.f32 0.0, %v1092
        %v1094 = vpop.f32.mrf.mxu0
        %v1095 = vadd.f32 0.0, %v1094
        %1096 = vmatmul.bf16.gmra.mxu0 %v385
        %v1097 = vpop.f32.mrf.mxu0
        %v1098 = vadd.f32 0.0, %v1097
        %v1099 = vpop.f32.mrf.mxu0
        %v1100 = vadd.f32 0.0, %v1099
        %1101 = vmatmul.bf16.gmra.mxu0 %v387
        %v1102 = vpop.f32.mrf.mxu0
        %v1103 = vadd.f32 0.0, %v1102
        %v1104 = vpop.f32.mrf.mxu0
        %v1105 = vadd.f32 0.0, %v1104
        %1106 = vmatmul.bf16.gmra.mxu0 %v389
        %v1107 = vpop.f32.mrf.mxu0
        %v1108 = vadd.f32 0.0, %v1107
        %v1109 = vpop.f32.mrf.mxu0
        %v1110 = vadd.f32 0.0, %v1109
        %1111 = vmatmul.bf16.gmra.mxu0 %v391
        %v1112 = vpop.f32.mrf.mxu0
        %v1113 = vadd.f32 0.0, %v1112
        %v1114 = vpop.f32.mrf.mxu0
        %v1115 = vadd.f32 0.0, %v1114
        %1116 = vmatmul.bf16.gmra.mxu0 %v393
        %v1117 = vpop.f32.mrf.mxu0
        %v1118 = vadd.f32 0.0, %v1117
        %v1119 = vpop.f32.mrf.mxu0
        %v1120 = vadd.f32 0.0, %v1119
        %1121 = vmatmul.bf16.gmra.mxu0 %v395
        %v1122 = vpop.f32.mrf.mxu0
        %v1123 = vadd.f32 0.0, %v1122
        %v1124 = vpop.f32.mrf.mxu0
        %v1125 = vadd.f32 0.0, %v1124
        %1126 = vmatmul.bf16.gmra.mxu0 %v397
        %v1127 = vpop.f32.mrf.mxu0
        %v1128 = vadd.f32 0.0, %v1127
        %v1129 = vpop.f32.mrf.mxu0
        %v1130 = vadd.f32 0.0, %v1129
        %1131 = vdwg.mxu0
        %1132 = vmatpush.bf16.msra.mxu0 %v638
        %1133 = vmatpush.bf16.msra.mxu0 %v635
        %1134 = vmatpush.bf16.msra.mxu0 %v632
        %1135 = vmatpush.bf16.msra.mxu0 %v629
        %1136 = vmatpush.bf16.msra.mxu0 %v626
        %1137 = vmatpush.bf16.msra.mxu0 %v623
        %1138 = vmatpush.bf16.msra.mxu0 %v620
        %1139 = vmatpush.bf16.msra.mxu0 %v617
        %1140 = vmatmul.bf16.gmra.mxu0 %v368
        %v1141 = vpop.f32.mrf.mxu0
        %v1142 = vadd.f32 %v1053, %v1141
        %v1143 = vpop.f32.mrf.mxu0
        %v1144 = vadd.f32 %v1055, %v1143
        %1145 = vmatmul.bf16.gmra.mxu0 %v370
        %v1146 = vpop.f32.mrf.mxu0
        %v1147 = vadd.f32 %v1058, %v1146
        %v1148 = vpop.f32.mrf.mxu0
        %v1149 = vadd.f32 %v1060, %v1148
        %1150 = vmatmul.bf16.gmra.mxu0 %v372
        %v1151 = vpop.f32.mrf.mxu0
        %v1152 = vadd.f32 %v1063, %v1151
        %v1153 = vpop.f32.mrf.mxu0
        %v1154 = vadd.f32 %v1065, %v1153
        %1155 = vmatmul.bf16.gmra.mxu0 %v374
        %v1156 = vpop.f32.mrf.mxu0
        %v1157 = vadd.f32 %v1068, %v1156
        %v1158 = vpop.f32.mrf.mxu0
        %v1159 = vadd.f32 %v1070, %v1158
        %1160 = vmatmul.bf16.gmra.mxu0 %v376
        %v1161 = vpop.f32.mrf.mxu0
        %v1162 = vadd.f32 %v1073, %v1161
        %v1163 = vpop.f32.mrf.mxu0
        %v1164 = vadd.f32 %v1075, %v1163
        %1165 = vmatmul.bf16.gmra.mxu0 %v378
        %v1166 = vpop.f32.mrf.mxu0
        %v1167 = vadd.f32 %v1078, %v1166
        %v1168 = vpop.f32.mrf.mxu0
        %v1169 = vadd.f32 %v1080, %v1168
        %1170 = vmatmul.bf16.gmra.mxu0 %v380
        %v1171 = vpop.f32.mrf.mxu0
        %v1172 = vadd.f32 %v1083, %v1171
        %v1173 = vpop.f32.mrf.mxu0
        %v1174 = vadd.f32 %v1085, %v1173
        %1175 = vmatmul.bf16.gmra.mxu0 %v382
        %v1176 = vpop.f32.mrf.mxu0
        %v1177 = vadd.f32 %v1088, %v1176
        %v1178 = vpop.f32.mrf.mxu0
        %v1179 = vadd.f32 %v1090, %v1178
        %1180 = vmatmul.bf16.gmra.mxu0 %v384
        %v1181 = vpop.f32.mrf.mxu0
        %v1182 = vadd.f32 %v1093, %v1181
        %v1183 = vpop.f32.mrf.mxu0
        %v1184 = vadd.f32 %v1095, %v1183
        %1185 = vmatmul.bf16.gmra.mxu0 %v386
        %v1186 = vpop.f32.mrf.mxu0
        %v1187 = vadd.f32 %v1098, %v1186
        %v1188 = vpop.f32.mrf.mxu0
        %v1189 = vadd.f32 %v1100, %v1188
        %1190 = vmatmul.bf16.gmra.mxu0 %v388
        %v1191 = vpop.f32.mrf.mxu0
        %v1192 = vadd.f32 %v1103, %v1191
        %v1193 = vpop.f32.mrf.mxu0
        %v1194 = vadd.f32 %v1105, %v1193
        %1195 = vmatmul.bf16.gmra.mxu0 %v390
        %v1196 = vpop.f32.mrf.mxu0
        %v1197 = vadd.f32 %v1108, %v1196
        %v1198 = vpop.f32.mrf.mxu0
        %v1199 = vadd.f32 %v1110, %v1198
        %1200 = vmatmul.bf16.gmra.mxu0 %v392
        %v1201 = vpop.f32.mrf.mxu0
        %v1202 = vadd.f32 %v1113, %v1201
        %v1203 = vpop.f32.mrf.mxu0
        %v1204 = vadd.f32 %v1115, %v1203
        %1205 = vmatmul.bf16.gmra.mxu0 %v394
        %v1206 = vpop.f32.mrf.mxu0
        %v1207 = vadd.f32 %v1118, %v1206
        %v1208 = vpop.f32.mrf.mxu0
        %v1209 = vadd.f32 %v1120, %v1208
        %1210 = vmatmul.bf16.gmra.mxu0 %v396
        %v1211 = vpop.f32.mrf.mxu0
        %v1212 = vadd.f32 %v1123, %v1211
        %v1213 = vpop.f32.mrf.mxu0
        %v1214 = vadd.f32 %v1125, %v1213
        %1215 = vmatmul.bf16.gmra.mxu0 %v398
        %v1216 = vpop.f32.mrf.mxu0
        %v1217 = vadd.f32 %v1128, %v1216
        %v1218 = vpop.f32.mrf.mxu0
        %v1219 = vadd.f32 %v1130, %v1218
        %1220 = vdwg.mxu0
        %v1221 = vld [vmem:[#allocation2] sm:$0x7]
        %v1222 = vmul.f32 %v786, %v786
        %v1223 = vmul.f32 %v964, %v964
        %v1224 = vmul.f32 %v1142, %v1142
        %v1225 = vmul.f32 %v788, %v788
        %v1226 = vmul.f32 %v966, %v966
        %v1227 = vmul.f32 %v1144, %v1144
        %v1228 = vmul.f32 %v791, %v791
        %v1229 = vmul.f32 %v969, %v969
        %v1230 = vmul.f32 %v1147, %v1147
        %v1231 = vmul.f32 %v793, %v793
        %v1232 = vmul.f32 %v971, %v971
        %v1233 = vmul.f32 %v1149, %v1149
        %v1234 = vmul.f32 %v796, %v796
        %v1235 = vmul.f32 %v974, %v974
        %v1236 = vmul.f32 %v1152, %v1152
        %v1237 = vmul.f32 %v798, %v798
        %v1238 = vmul.f32 %v976, %v976
        %v1239 = vmul.f32 %v1154, %v1154
        %v1240 = vmul.f32 %v801, %v801
        %v1241 = vmul.f32 %v979, %v979
        %v1242 = vmul.f32 %v1157, %v1157
        %v1243 = vmul.f32 %v803, %v803
        %v1244 = vmul.f32 %v981, %v981
        %v1245 = vmul.f32 %v1159, %v1159
        %v1246 = vmul.f32 %v806, %v806
        %v1247 = vmul.f32 %v984, %v984
        %v1248 = vmul.f32 %v1162, %v1162
        %v1249 = vmul.f32 %v808, %v808
        %v1250 = vmul.f32 %v986, %v986
        %v1251 = vmul.f32 %v1164, %v1164
        %v1252 = vmul.f32 %v811, %v811
        %v1253 = vmul.f32 %v989, %v989
        %v1254 = vmul.f32 %v1167, %v1167
        %v1255 = vmul.f32 %v813, %v813
        %v1256 = vmul.f32 %v991, %v991
        %v1257 = vmul.f32 %v1169, %v1169
        %v1258 = vmul.f32 %v816, %v816
        %v1259 = vmul.f32 %v994, %v994
        %v1260 = vmul.f32 %v1172, %v1172
        %v1261 = vmul.f32 %v818, %v818
        %v1262 = vmul.f32 %v996, %v996
        %v1263 = vmul.f32 %v1174, %v1174
        %v1264 = vmul.f32 %v821, %v821
        %v1265 = vmul.f32 %v999, %v999
        %v1266 = vmul.f32 %v1177, %v1177
        %v1267 = vmul.f32 %v823, %v823
        %v1268 = vmul.f32 %v1001, %v1001
        %v1269 = vmul.f32 %v1179, %v1179
        %v1270 = vmul.f32 %v826, %v826
        %v1271 = vmul.f32 %v1004, %v1004
        %v1272 = vmul.f32 %v1182, %v1182
        %v1273 = vmul.f32 %v828, %v828
        %v1274 = vmul.f32 %v1006, %v1006
        %v1275 = vmul.f32 %v1184, %v1184
        %v1276 = vmul.f32 %v831, %v831
        %v1277 = vmul.f32 %v1009, %v1009
        %v1278 = vmul.f32 %v1187, %v1187
        %v1279 = vmul.f32 %v833, %v833
        %v1280 = vmul.f32 %v1011, %v1011
        %v1281 = vmul.f32 %v1189, %v1189
        %v1282 = vmul.f32 %v836, %v836
        %v1283 = vmul.f32 %v1014, %v1014
        %v1284 = vmul.f32 %v1192, %v1192
        %v1285 = vmul.f32 %v838, %v838
        %v1286 = vmul.f32 %v1016, %v1016
        %v1287 = vmul.f32 %v1194, %v1194
        %v1288 = vmul.f32 %v841, %v841
        %v1289 = vmul.f32 %v1019, %v1019
        %v1290 = vmul.f32 %v1197, %v1197
        %v1291 = vmul.f32 %v843, %v843
        %v1292 = vmul.f32 %v1021, %v1021
        %v1293 = vmul.f32 %v1199, %v1199
        %v1294 = vmul.f32 %v846, %v846
        %v1295 = vmul.f32 %v1024, %v1024
        %v1296 = vmul.f32 %v1202, %v1202
        %v1297 = vmul.f32 %v848, %v848
        %v1298 = vmul.f32 %v1026, %v1026
        %v1299 = vmul.f32 %v1204, %v1204
        %v1300 = vmul.f32 %v851, %v851
        %v1301 = vmul.f32 %v1029, %v1029
        %v1302 = vmul.f32 %v1207, %v1207
        %v1303 = vmul.f32 %v853, %v853
        %v1304 = vmul.f32 %v1031, %v1031
        %v1305 = vmul.f32 %v1209, %v1209
        %v1306 = vmul.f32 %v856, %v856
        %v1307 = vmul.f32 %v1034, %v1034
        %v1308 = vmul.f32 %v1212, %v1212
        %v1309 = vmul.f32 %v858, %v858
        %v1310 = vmul.f32 %v1036, %v1036
        %v1311 = vmul.f32 %v1214, %v1214
        %v1312 = vmul.f32 %v861, %v861
        %v1313 = vmul.f32 %v1039, %v1039
        %v1314 = vmul.f32 %v1217, %v1217
        %v1315 = vmul.f32 %v863, %v863
        %v1316 = vmul.f32 %v1041, %v1041
        %v1317 = vmul.f32 %v1219, %v1219
        %v1318 = vadd.f32 %v1222, %v1225
        %v1319 = vadd.f32 %v1318, %v1228
        %v1320 = vadd.f32 %v1319, %v1231
        %v1321 = vadd.f32 %v1320, %v1234
        %v1322 = vadd.f32 %v1321, %v1237
        %v1323 = vadd.f32 %v1322, %v1240
        %v1324 = vadd.f32 %v1323, %v1243
        %v1325 = vadd.f32 %v1324, %v1246
        %v1326 = vadd.f32 %v1325, %v1249
        %v1327 = vadd.f32 %v1326, %v1252
        %v1328 = vadd.f32 %v1327, %v1255
        %v1329 = vadd.f32 %v1328, %v1258
        %v1330 = vadd.f32 %v1329, %v1261
        %v1331 = vadd.f32 %v1330, %v1264
        %v1332 = vadd.f32 %v1331, %v1267
        %v1333 = vadd.f32 %v1332, %v1270
        %v1334 = vadd.f32 %v1333, %v1273
        %v1335 = vadd.f32 %v1334, %v1276
        %v1336 = vadd.f32 %v1335, %v1279
        %v1337 = vadd.f32 %v1336, %v1282
        %v1338 = vadd.f32 %v1337, %v1285
        %v1339 = vadd.f32 %v1338, %v1288
        %v1340 = vadd.f32 %v1339, %v1291
        %v1341 = vadd.f32 %v1340, %v1294
        %v1342 = vadd.f32 %v1341, %v1297
        %v1343 = vadd.f32 %v1342, %v1300
        %v1344 = vadd.f32 %v1343, %v1303
        %v1345 = vadd.f32 %v1344, %v1306
        %v1346 = vadd.f32 %v1345, %v1309
        %v1347 = vadd.f32 %v1346, %v1312
        %v1348 = vadd.f32 %v1347, %v1315
        %v1349 = vrot.slane %v1348, 4
        %v1350 = vadd.f32 %v1348, %v1349
        %v1351 = vrot.slane %v1350, 2
        %v1352 = vadd.f32 %v1350, %v1351
        %v1353 = vrot.slane %v1352, 1
        %v1354 = vadd.f32 %v1352, %v1353
        %v1355 = vadd.f32 %v1223, %v1226
        %v1356 = vadd.f32 %v1355, %v1229
        %v1357 = vadd.f32 %v1356, %v1232
        %v1358 = vadd.f32 %v1357, %v1235
        %v1359 = vadd.f32 %v1358, %v1238
        %v1360 = vadd.f32 %v1359, %v1241
        %v1361 = vadd.f32 %v1360, %v1244
        %v1362 = vadd.f32 %v1361, %v1247
        %v1363 = vadd.f32 %v1362, %v1250
        %v1364 = vadd.f32 %v1363, %v1253
        %v1365 = vadd.f32 %v1364, %v1256
        %v1366 = vadd.f32 %v1365, %v1259
        %v1367 = vadd.f32 %v1366, %v1262
        %v1368 = vadd.f32 %v1367, %v1265
        %v1369 = vadd.f32 %v1368, %v1268
        %v1370 = vadd.f32 %v1369, %v1271
        %v1371 = vadd.f32 %v1370, %v1274
        %v1372 = vadd.f32 %v1371, %v1277
        %v1373 = vadd.f32 %v1372, %v1280
        %v1374 = vadd.f32 %v1373, %v1283
        %v1375 = vadd.f32 %v1374, %v1286
        %v1376 = vadd.f32 %v1375, %v1289
        %v1377 = vadd.f32 %v1376, %v1292
        %v1378 = vadd.f32 %v1377, %v1295
        %v1379 = vadd.f32 %v1378, %v1298
        %v1380 = vadd.f32 %v1379, %v1301
        %v1381 = vadd.f32 %v1380, %v1304
        %v1382 = vadd.f32 %v1381, %v1307
        %v1383 = vadd.f32 %v1382, %v1310
        %v1384 = vadd.f32 %v1383, %v1313
        %v1385 = vadd.f32 %v1384, %v1316
        %v1386 = vrot.slane %v1385, 4
        %v1387 = vadd.f32 %v1385, %v1386
        %v1388 = vrot.slane %v1387, 2
        %v1389 = vadd.f32 %v1387, %v1388
        %v1390 = vrot.slane %v1389, 1
        %v1391 = vadd.f32 %v1389, %v1390
        %vm1392 = vcmask 15360
        %v1393 = vsel %vm1392, %v1224, 0.0
        %v1394 = vsel %vm1392, %v1227, 0.0
        %v1395 = vadd.f32 %v1393, %v1394
        %v1396 = vsel %vm1392, %v1230, 0.0
        %v1397 = vadd.f32 %v1395, %v1396
        %v1398 = vsel %vm1392, %v1233, 0.0
        %v1399 = vadd.f32 %v1397, %v1398
        %v1400 = vsel %vm1392, %v1236, 0.0
        %v1401 = vadd.f32 %v1399, %v1400
        %v1402 = vsel %vm1392, %v1239, 0.0
        %v1403 = vadd.f32 %v1401, %v1402
        %v1404 = vsel %vm1392, %v1242, 0.0
        %v1405 = vadd.f32 %v1403, %v1404
        %v1406 = vsel %vm1392, %v1245, 0.0
        %v1407 = vadd.f32 %v1405, %v1406
        %v1408 = vsel %vm1392, %v1248, 0.0
        %v1409 = vadd.f32 %v1407, %v1408
        %v1410 = vsel %vm1392, %v1251, 0.0
        %v1411 = vadd.f32 %v1409, %v1410
        %v1412 = vsel %vm1392, %v1254, 0.0
        %v1413 = vadd.f32 %v1411, %v1412
        %v1414 = vsel %vm1392, %v1257, 0.0
        %v1415 = vadd.f32 %v1413, %v1414
        %v1416 = vsel %vm1392, %v1260, 0.0
        %v1417 = vadd.f32 %v1415, %v1416
        %v1418 = vsel %vm1392, %v1263, 0.0
        %v1419 = vadd.f32 %v1417, %v1418
        %v1420 = vsel %vm1392, %v1266, 0.0
        %v1421 = vadd.f32 %v1419, %v1420
        %v1422 = vsel %vm1392, %v1269, 0.0
        %v1423 = vadd.f32 %v1421, %v1422
        %v1424 = vsel %vm1392, %v1272, 0.0
        %v1425 = vadd.f32 %v1423, %v1424
        %v1426 = vsel %vm1392, %v1275, 0.0
        %v1427 = vadd.f32 %v1425, %v1426
        %v1428 = vsel %vm1392, %v1278, 0.0
        %v1429 = vadd.f32 %v1427, %v1428
        %v1430 = vsel %vm1392, %v1281, 0.0
        %v1431 = vadd.f32 %v1429, %v1430
        %v1432 = vsel %vm1392, %v1284, 0.0
        %v1433 = vadd.f32 %v1431, %v1432
        %v1434 = vsel %vm1392, %v1287, 0.0
        %v1435 = vadd.f32 %v1433, %v1434
        %v1436 = vsel %vm1392, %v1290, 0.0
        %v1437 = vadd.f32 %v1435, %v1436
        %v1438 = vsel %vm1392, %v1293, 0.0
        %v1439 = vadd.f32 %v1437, %v1438
        %v1440 = vsel %vm1392, %v1296, 0.0
        %v1441 = vadd.f32 %v1439, %v1440
        %v1442 = vsel %vm1392, %v1299, 0.0
        %v1443 = vadd.f32 %v1441, %v1442
        %v1444 = vsel %vm1392, %v1302, 0.0
        %v1445 = vadd.f32 %v1443, %v1444
        %v1446 = vsel %vm1392, %v1305, 0.0
        %v1447 = vadd.f32 %v1445, %v1446
        %v1448 = vsel %vm1392, %v1308, 0.0
        %v1449 = vadd.f32 %v1447, %v1448
        %v1450 = vsel %vm1392, %v1311, 0.0
        %v1451 = vadd.f32 %v1449, %v1450
        %v1452 = vsel %vm1392, %v1314, 0.0
        %v1453 = vadd.f32 %v1451, %v1452
        %v1454 = vsel %vm1392, %v1317, 0.0
        %v1455 = vadd.f32 %v1453, %v1454
        %v1456 = vrot.slane %v1455, 4
        %v1457 = vadd.f32 %v1455, %v1456
        %v1458 = vrot.slane %v1457, 2
        %v1459 = vadd.f32 %v1457, %v1458
        %v1460 = vrot.slane %v1459, 1
        %v1461 = vadd.f32 %v1459, %v1460
        %v1465 = vrot.slane %v1391, 7
        %v1466 = vrot.slane %v1461, 6
        %vm1467 = vcmask 1040384
        %v1468 = vsel %vm1467, %v1354, %v1465
        %vm1469 = vcmask 1041408
        %v1470 = vsel %vm1469, %v1468, %v1466
        %v1472 = vadd.f32 %v1221, %v1470
        %v1473 = vlaneseq
        %vm1474 = vcmp.ge.s32.totalorder %v1473, 0
        %vm1475 = vcmp.lt.s32.totalorder %v1473, 258
        %vm1476 = vmand %vm1474, %vm1475
        %1477 = vst.msk [vmem:[#allocation2] sm:$0x7] %vm1476, %v1472
        // Predicated region
        $region33: #{tpu_custom_call.1} parent=27 // pred_check
          %p1478 = pneg %p166
        $region34: #{tpu_custom_call.1} parent=27 // pred_check_branch
          %1480 = sbr.rel (%p1478) target = $region36
        $region35: #{tpu_custom_call.1} parent=27 // pred_region
          %v1481 = vld [vmem:[#allocation2] sm:$0x7]
          %v1483 = vperm.slane %v1481, 0
          %v1484 = vperm.slane %v1481, 1
          %v1485 = vperm.slane %v1481, 2
          %1489 = vst [vmem:[%s156] sm:$0xff] %v1483
          %1490 = vst [vmem:[%s156 + $0x8] sm:$0xff] %v1484
          %1491 = vst.msk [vmem:[%s156 + $0x10] sm:$0xff] %vm1392, %v1485
        $region36: #{tpu_custom_call.1} parent=27 // pred_fallthru
          _
        %s1492 = sand.u32 %s85, 1
        %s1493 = scalar_lea.sflag [#allocation4], %s1492
        %s1494 = sand.u32 %s85, 1
        %s1495 = smul.addr %s1494, 24
        %s1496 = scalar_lea.vmem [#allocation3], %s1495
        // Predicated region
        $region37: #{tpu_custom_call.1} parent=27 // pred_check
          %p1497 = pneg %p95
        $region38: #{tpu_custom_call.1} parent=27 // pred_check_branch
          %1499 = sbr.rel (%p1497) target = $region40
        $region39: #{tpu_custom_call.1} parent=27 // pred_region
          %1501 = vsyncadd %s1493, 0
          %s1502 = smul.addr %s20, 3
          %s1503 = smul.addr %s1502, 8
          %s1504 = scalar_lea.hbm %s2, %s1503
          %s1506 = sshll.u32 %s1496, 4
          %s1507 = int_to_ptr.vmem [resolvable:$true] %s1506
          %s1508 = sshll.u32 %s1504, 4
          %s1509 = int_to_ptr.hbm [resolvable:$true] %s1508
          %1511 = dma.vmem_to_hbm [thread:$0]  %s1507, 384, %s1509, %s1493
        $region40: #{tpu_custom_call.1} parent=27 // pred_fallthru
          _
      $region28: #{tpu_custom_call.1} parent=5 // pred_fallthru
        _
      %p1512 = scmp.le.s32.totalorder 2, %s11
      // Predicated region
      $region41: #{tpu_custom_call.1} parent=5 // pred_check
        %p1513 = pneg %p1512
      $region42: #{tpu_custom_call.1} parent=5 // pred_check_branch
        %1515 = sbr.rel (%p1513) target = $region44
      $region43: #{tpu_custom_call.1} parent=5 // pred_region
        %s1516 = ssub.s32 %s11, 2
        // Predicated region
        $region45: #{tpu_custom_call.1} parent=43 // pred_check
          %p1517 = pneg %p101
        $region46: #{tpu_custom_call.1} parent=43 // pred_check_branch
          %1519 = sbr.rel (%p1517) target = $region48
        $region47: #{tpu_custom_call.1} parent=43 // pred_region
          %s1520 = sand.u32 %s86, 1
          %s1521 = scalar_lea.sflag [#allocation4], %s1520
          %s1522 = sand.u32 %s86, 1
          %s1523 = smul.addr %s1522, 24
          %s1524 = scalar_lea.vmem [#allocation3], %s1523
          %1526 = dma.done %s1521, 384
        $region48: #{tpu_custom_call.1} parent=43 // pred_fallthru
          _
      $region44: #{tpu_custom_call.1} parent=5 // pred_fallthru
        _
    $region6: #{tpu_custom_call.1} parent=1 // loop_footer
      %s15 = sadd.s32 1, %s11
    $region7: #{tpu_custom_call.1} parent=1 // loop_footer_branch
      %10 = sbr.rel target = $region3
    $region8: #{tpu_custom_call.1} parent=1 // loop_exit
      _
    %1527 = vsyncpa [#allocation4], 1
    %s1528 = scalar_lea.sflag [#allocation4], 1
    %1529 = vsyncpa %s1528, 1

</llo_original>
